<compile_context>
chip_gen: v7x
topology: tpu7x:2x2x1
jax: 0.10.0
libtpu: 0.0.40
codegen_flags: <defaults>
</compile_context>

<pallas_src>
from functools import partial

import numpy as np
import jax
import jax.numpy as jnp
from jax.experimental import pallas as pl
from jax.experimental.pallas import tpu as pltpu


def _round_up(x, m):
    return ((x + m - 1) // m) * m


def _im2col(x, r, transpose=False):
    # x: (N, C, H, W) L2-normalized features, zero-padded by r (same as the
    # reference's _get_neighborhood / Conv2d(padding=r)).
    #   transpose=False -> (N, H*W, C*K*K)   (phi_p: rows are patches)
    #   transpose=True  -> (N, C*K*K, H*W)   (phi_qT: columns are patches)
    N, C, H, W = x.shape
    K = 2 * r + 1
    xp = jnp.pad(x, ((0, 0), (0, 0), (r, r), (r, r)))
    cols = [xp[:, :, di:di + H, dj:dj + W] for di in range(K) for dj in range(K)]
    p = jnp.stack(cols, axis=2)                                  # (N, C, K*K, H, W)
    if transpose:
        return p.reshape(N, C * K * K, H * W)                    # (N, D, HW)
    return p.transpose(0, 3, 4, 1, 2).reshape(N, H * W, C * K * K)  # (N, HW, D)


def _make_nbb_kernel(TM, TN, n_q, n_k, HW, HW_padM, HW_padN):
    NEG_INF = float("-inf")
    BIG = 2 ** 30          # Python int -> literal in the trace (NOT a captured const)

    def kernel(phi_p_ref, phi_qT_ref, p_near_ref, q_near_ref,
               acc_ref, m_p_ref, a_p_ref, m_q_ref):
        i = pl.program_id(1)   # P-row tile
        j = pl.program_id(2)   # Q-column tile
        k = pl.program_id(3)   # contraction chunk (innermost)

        a = phi_p_ref[0]       # (TM, TKd)  bf16
        b = phi_qT_ref[0]      # (TKd, TN)  bf16 -- pre-transposed in HBM
        # Partial C[p, q] = <patch_P(p), patch_Q(q)> over this Dp chunk (f32 acc).
        part = jnp.dot(a, b, preferred_element_type=jnp.float32)   # (TM, TN)

        if n_k > 1:
            @pl.when(k == 0)
            def _():
                acc_ref[...] = jnp.zeros_like(acc_ref)
            acc_ref[...] += part

        def finalize():
            c = acc_ref[...] if n_k > 1 else part                  # (TM, TN) f32

            col_ids = jax.lax.broadcasted_iota(jnp.int32, (TM, TN), 1) + j * TN
            row_ids = jax.lax.broadcasted_iota(jnp.int32, (TM, TN), 0) + i * TM

            # ---- p_near: running argmax over Q (axis=1) ----
            @pl.when(j == 0)
            def _():
                m_p_ref[...] = jnp.full((TM, 1), NEG_INF, jnp.float32)
                a_p_ref[...] = jnp.zeros((TM, 1), jnp.int32)

            cp = jnp.where(col_ids < HW, c, NEG_INF) if HW < HW_padN else c
            t_max = jnp.max(cp, axis=1, keepdims=True)                       # (TM,1)
            t_arg = jnp.min(jnp.where(cp == t_max, col_ids, BIG),
                            axis=1, keepdims=True)                           # (TM,1)
            better_p = t_max > m_p_ref[...]        # strict >: first occurrence
            a_p_ref[...] = jnp.where(better_p, t_arg, a_p_ref[...])
            m_p_ref[...] = jnp.maximum(m_p_ref[...], t_max)

            # p_near block is resident across the j/k sweep; write once at the
            # end of the Q sweep (flushed to HBM when the P-tile changes).
            @pl.when(j == n_q - 1)
            def _():
                p_near_ref[...] = a_p_ref[...].reshape(1, TM, 1)

            # ---- q_near: running argmax over P (axis=0), RMW directly on the
            #      batch-resident output block; only the max needs scratch ----
            @pl.when(i == 0)
            def _():
                m_q_ref[j] = jnp.full((1, TN), NEG_INF, jnp.float32)

            cq = jnp.where(row_ids < HW, c, NEG_INF) if HW < HW_padM else c
            s_max = jnp.max(cq, axis=0, keepdims=True)                       # (1,TN)
            s_arg = jnp.min(jnp.where(cq == s_max, row_ids, BIG),
                            axis=0, keepdims=True)                           # (1,TN)
            off = pl.multiple_of(j * TN, TN)
            prev_m = m_q_ref[j]
            prev_a = q_near_ref[0, :, pl.ds(off, TN)]   # stale at i==0, but then
            better_q = s_max > prev_m                    # better_q is all-True
            q_near_ref[0, :, pl.ds(off, TN)] = jnp.where(better_q, s_arg, prev_a)
            m_q_ref[j] = jnp.maximum(prev_m, s_max)

        if n_k > 1:
            pl.when(k == n_k - 1)(finalize)
        else:
            finalize()

    return kernel


@partial(jax.jit, static_argnames=("neigh_rad",))
def neural_best_buddies(Ps, Qs, neigh_rad, gamma=0.05):
    # Ps, Qs: NCHW float tensors (same convention as the PyTorch module).
    N, C, H, W = Ps.shape
    HW = H * W
    K = 2 * neigh_rad + 1
    D = C * K * K

    def l2_and_norm(X):
        X = X.astype(jnp.float32)
        l2 = jnp.sqrt(jnp.sum(X * X, axis=1))                    # (N, H, W)
        Xn = X / jnp.maximum(l2, 1e-12)[:, None, :, :]           # per-pixel unit vecs
        # Cast the normalized features to bf16 here: halves the im2col
        # materialization and the kernel's HBM stream; f32 accumulation below.
        return l2.reshape(N, HW), Xn.astype(jnp.bfloat16)

    P_l2, Pn = l2_and_norm(Ps)
    Q_l2, Qn = l2_and_norm(Qs)

    # Tile sizes:
    #  * TM up to 512 (bf16 roofline crossover on v6e/v7x; multiple of 16 for
    #    bf16 sublane packing), clamped for small inputs.
    #  * TN up to 512 (lane-dense, multiple of 128).
    #  * TKd <= 1024 contraction chunk so VMEM is bounded independent of D.
    TM = min(512, _round_up(HW, 16))
    TN = min(512, _round_up(HW, 128))
    TKd = 1024 if D > 1024 else _round_up(D, 128)
    Dp = _round_up(D, TKd)
    HW_padM = _round_up(HW, TM)
    HW_padN = _round_up(HW, TN)
    n_p = HW_padM // TM
    n_q = HW_padN // TN
    n_k = Dp // TKd

    # TODO(synk): for very large feature maps, replace the K^2 im2col expansion
    # with halo-streamed shifted matmuls to cut HBM bytes/footprint by ~K^2.
    phi_p = _im2col(Pn, neigh_rad)                    # (N, HW, D)  bf16
    phi_qT = _im2col(Qn, neigh_rad, transpose=True)   # (N, D, HW)  bf16, pre-transposed
    phi_p = jnp.pad(phi_p, ((0, 0), (0, HW_padM - HW), (0, Dp - D)))
    phi_qT = jnp.pad(phi_qT, ((0, 0), (0, Dp - D), (0, HW_padN - HW)))

    kernel = _make_nbb_kernel(TM, TN, n_q, n_k, HW, HW_padM, HW_padN)

    grid_spec = pltpu.PrefetchScalarGridSpec(
        num_scalar_prefetch=0,
        grid=(N, n_p, n_q, n_k),
        in_specs=[pl.BlockSpec((1, TM, TKd), lambda n, i, j, k: (n, i, k)),
                  pl.BlockSpec((1, TKd, TN), lambda n, i, j, k: (n, k, j))],
        out_specs=[pl.BlockSpec((1, TM, 1), lambda n, i, j, k: (n, i, 0)),
                   # q_near: one batch-resident row, flushed once per batch elem
                   pl.BlockSpec((1, 1, HW_padN), lambda n, i, j, k: (n, 0, 0))],
        scratch_shapes=[pltpu.VMEM((TM, TN), jnp.float32),        # f32 acc over k chunks
                        pltpu.VMEM((TM, 1), jnp.float32),         # running max  (rows)
                        pltpu.VMEM((TM, 1), jnp.int32),           # running arg  (rows)
                        pltpu.VMEM((n_q, 1, TN), jnp.float32)],   # running max  (cols)
    )
    p_near3, q_near3 = pl.pallas_call(
        kernel,
        out_shape=(jax.ShapeDtypeStruct((N, HW_padM, 1), jnp.int32),
                   jax.ShapeDtypeStruct((N, 1, HW_padN), jnp.int32)),
        grid_spec=grid_spec,
        compiler_params=pltpu.CompilerParams(
            dimension_semantics=("parallel", "arbitrary", "arbitrary", "arbitrary"),
            vmem_limit_bytes=48 * 1024 * 1024),
    )(phi_p, phi_qT)

    p_near = p_near3[:, :HW, 0]                                  # (N, HW)
    q_near = q_near3[:, 0, :HW]                                  # (N, HW)

    def minmax_norm(l2):
        mn = jnp.min(l2, axis=1, keepdims=True)
        mx = jnp.max(l2, axis=1, keepdims=True)
        return (l2 - mn) / jnp.maximum(mx - mn, 1e-12)

    P_norm = minmax_norm(P_l2)                                   # (N, HW)
    Q_norm = minmax_norm(Q_l2)                                   # (N, HW)

    # Best-buddy condition: mutual nearest neighbor + activation thresholds.
    q_of_p = jnp.take_along_axis(q_near, p_near, axis=1)         # Q_nearest[P_nearest[i]]
    qn_of_p = jnp.take_along_axis(Q_norm, p_near, axis=1)        # Q_normalized[P_nearest[i]]
    idx = jnp.arange(HW, dtype=p_near.dtype)[None, :]
    mask = (q_of_p == idx) & (P_norm > gamma) & (qn_of_p > gamma)
    return mask, p_near


if __name__ == "__main__":
    key = jax.random.PRNGKey(0)
    kp, kq = jax.random.split(key)
    N, C, H, W = 2, 4, 8, 8          # small shapes; HW = 64 pixels per image
    neigh_rad = 1                    # 3x3 patches
    Ps = jax.random.normal(kp, (N, C, H, W), dtype=jnp.float32)
    Qs = jax.random.normal(kq, (N, C, H, W), dtype=jnp.float32)

    mask, p_near = neural_best_buddies(Ps, Qs, neigh_rad=neigh_rad, gamma=0.05)
    jax.block_until_ready((mask, p_near))

    mask_np = np.asarray(mask)
    pn_np = np.asarray(p_near)
    assert pn_np.shape == (N, H * W)
    assert pn_np.min() >= 0 and pn_np.max() < H * W

    # TODO(synk): the variable-length list of (i, P_nearest[i]) pairs is a
    # data-dependent Python list in the reference; it is assembled on host.
    best_buddies = []
    for n in range(N):
        for i in range(H * W):
            if mask_np[n, i]:
                best_buddies.append((i, int(pn_np[n, i])))

    print("KERNEL_OK")
</pallas_src>

<mosaic_0001>
module attributes {stable_mosaic.version = 11 : i64} {
  func.func @kernel(%arg0: i32, %arg1: i32, %arg2: i32, %arg3: i32, %arg4: memref<1x64x128xbf16, #tpu.memory_space<vmem>>, %arg5: memref<1x128x128xbf16, #tpu.memory_space<vmem>>, %arg6: memref<1x64x1xi32, #tpu.memory_space<vmem>>, %arg7: memref<1x1x128xi32, #tpu.memory_space<vmem>>, %arg8: memref<64x128xf32, #tpu.memory_space<vmem>>, %arg9: memref<64x1xf32, #tpu.memory_space<vmem>>, %arg10: memref<64x1xi32, #tpu.memory_space<vmem>>, %arg11: memref<1x1x128xf32, #tpu.memory_space<vmem>>) attributes {dimension_semantics = [#tpu.dimension_semantics<parallel>, #tpu.dimension_semantics<arbitrary>, #tpu.dimension_semantics<arbitrary>, #tpu.dimension_semantics<arbitrary>], iteration_bounds = array<i64: 2, 1, 1, 1>, scalar_prefetch = 0 : i64, scratch_operands = 4 : i64, tpu.core_type = #tpu.core_type<tc>, window_params = [{transform_indices = @transform_0, window_bounds = array<i64: 1, 64, 128>}, {transform_indices = @transform_1, window_bounds = array<i64: 1, 128, 128>}, {transform_indices = @transform_2, window_bounds = array<i64: 1, 64, 1>}, {transform_indices = @transform_3, window_bounds = array<i64: 1, 1, 128>}]} {
    %c0 = arith.constant 0 : index
    %c0_0 = arith.constant 0 : index
    %c0_1 = arith.constant 0 : index
    %0 = vector.load %arg4[%c0, %c0_0, %c0_1] : memref<1x64x128xbf16, #tpu.memory_space<vmem>>, vector<1x64x128xbf16>
    %1 = vector.shape_cast %0 : vector<1x64x128xbf16> to vector<64x128xbf16>
    %c0_2 = arith.constant 0 : index
    %c0_3 = arith.constant 0 : index
    %c0_4 = arith.constant 0 : index
    %2 = vector.load %arg5[%c0_2, %c0_3, %c0_4] : memref<1x128x128xbf16, #tpu.memory_space<vmem>>, vector<1x128x128xbf16>
    %3 = vector.shape_cast %2 : vector<1x128x128xbf16> to vector<128x128xbf16>
    %cst = arith.constant dense<0.000000e+00> : vector<64x128xf32>
    %4 = tpu.matmul %1, %3, %cst {dimension_numbers = #tpu.dot_dimension_numbers<[1], [0], [0], [1], [0, 0, 1, 1], [], []>} : vector<64x128xbf16>, vector<128x128xbf16>, vector<64x128xf32> -> vector<64x128xf32>
    %5 = tpu.iota {dimensions = array<i32: 1>} : vector<64x128xi32>
    %c128_i32 = arith.constant 128 : i32
    %6 = arith.muli %arg2, %c128_i32 : i32
    %7 = vector.broadcast %6 : i32 to vector<64x128xi32>
    %8 = arith.addi %5, %7 : vector<64x128xi32>
    %9 = tpu.iota {dimensions = array<i32: 0>} : vector<64x128xi32>
    %c64_i32 = arith.constant 64 : i32
    %10 = arith.muli %arg1, %c64_i32 : i32
    %11 = vector.broadcast %10 : i32 to vector<64x128xi32>
    %12 = arith.addi %9, %11 : vector<64x128xi32>
    %c0_i32 = arith.constant 0 : i32
    %13 = arith.cmpi eq, %arg2, %c0_i32 : i32
    %14 = arith.extui %13 : i1 to i32
    %c0_i32_5 = arith.constant 0 : i32
    %15 = arith.cmpi ne, %14, %c0_i32_5 : i32
    scf.if %15 {
      %cst_36 = arith.constant 0xFF800000 : f32
      %69 = vector.broadcast %cst_36 : f32 to vector<64x1xf32>
      %c0_37 = arith.constant 0 : index
      %c0_38 = arith.constant 0 : index
      %70 = vector.load %arg9[%c0_37, %c0_38] : memref<64x1xf32, #tpu.memory_space<vmem>>, vector<64x1xf32>
      tpu.vector_store %arg9[%c0_37, %c0_38], %69 {strides = array<i32>} : memref<64x1xf32, #tpu.memory_space<vmem>>, vector<64x1xf32>,
      %c0_i32_39 = arith.constant 0 : i32
      %71 = vector.broadcast %c0_i32_39 : i32 to vector<64x1xi32>
      %c0_40 = arith.constant 0 : index
      %c0_41 = arith.constant 0 : index
      %72 = vector.load %arg10[%c0_40, %c0_41] : memref<64x1xi32, #tpu.memory_space<vmem>>, vector<64x1xi32>
      tpu.vector_store %arg10[%c0_40, %c0_41], %71 {strides = array<i32>} : memref<64x1xi32, #tpu.memory_space<vmem>>, vector<64x1xi32>,
    } else {
    }
    %c64_i32_6 = arith.constant 64 : i32
    %16 = vector.broadcast %c64_i32_6 : i32 to vector<64x128xi32>
    %17 = arith.cmpi slt, %8, %16 : vector<64x128xi32>
    %cst_7 = arith.constant 0xFF800000 : f32
    %18 = vector.broadcast %cst_7 : f32 to vector<64x128xf32>
    %19 = arith.select %17, %4, %18 : vector<64x128xi1>, vector<64x128xf32>
    %cst_8 = arith.constant dense<0xFF800000> : vector<64xf32>
    %20 = vector.multi_reduction <maximumf>, %19, %cst_8 [1] : vector<64x128xf32> to vector<64xf32>
    %21 = vector.shape_cast %20 : vector<64xf32> to vector<64x1xf32>
    %22 = vector.broadcast %21 : vector<64x1xf32> to vector<64x128xf32>
    %23 = arith.cmpf oeq, %19, %22 : vector<64x128xf32>
    %c1073741824_i32 = arith.constant 1073741824 : i32
    %24 = vector.broadcast %c1073741824_i32 : i32 to vector<64x128xi32>
    %25 = arith.select %23, %8, %24 : vector<64x128xi1>, vector<64x128xi32>
    %cst_9 = arith.constant dense<2147483647> : vector<64xi32>
    %26 = vector.multi_reduction <minsi>, %25, %cst_9 [1] : vector<64x128xi32> to vector<64xi32>
    %27 = vector.shape_cast %26 : vector<64xi32> to vector<64x1xi32>
    %c0_10 = arith.constant 0 : index
    %c0_11 = arith.constant 0 : index
    %28 = vector.load %arg9[%c0_10, %c0_11] : memref<64x1xf32, #tpu.memory_space<vmem>>, vector<64x1xf32>
    %29 = arith.cmpf ogt, %21, %28 : vector<64x1xf32>
    %c0_12 = arith.constant 0 : index
    %c0_13 = arith.constant 0 : index
    %30 = vector.load %arg10[%c0_12, %c0_13] : memref<64x1xi32, #tpu.memory_space<vmem>>, vector<64x1xi32>
    %31 = arith.select %29, %27, %30 : vector<64x1xi1>, vector<64x1xi32>
    %c0_14 = arith.constant 0 : index
    %c0_15 = arith.constant 0 : index
    %32 = vector.load %arg10[%c0_14, %c0_15] : memref<64x1xi32, #tpu.memory_space<vmem>>, vector<64x1xi32>
    tpu.vector_store %arg10[%c0_14, %c0_15], %31 {strides = array<i32>} : memref<64x1xi32, #tpu.memory_space<vmem>>, vector<64x1xi32>,
    %c0_16 = arith.constant 0 : index
    %c0_17 = arith.constant 0 : index
    %33 = vector.load %arg9[%c0_16, %c0_17] : memref<64x1xf32, #tpu.memory_space<vmem>>, vector<64x1xf32>
    %34 = arith.maximumf %33, %21 : vector<64x1xf32>
    %c0_18 = arith.constant 0 : index
    %c0_19 = arith.constant 0 : index
    %35 = vector.load %arg9[%c0_18, %c0_19] : memref<64x1xf32, #tpu.memory_space<vmem>>, vector<64x1xf32>
    tpu.vector_store %arg9[%c0_18, %c0_19], %34 {strides = array<i32>} : memref<64x1xf32, #tpu.memory_space<vmem>>, vector<64x1xf32>,
    %c0_i32_20 = arith.constant 0 : i32
    %36 = arith.cmpi eq, %arg2, %c0_i32_20 : i32
    %37 = arith.extui %36 : i1 to i32
    %c0_i32_21 = arith.constant 0 : i32
    %38 = arith.cmpi ne, %37, %c0_i32_21 : i32
    scf.if %38 {
      %c0_36 = arith.constant 0 : index
      %c0_37 = arith.constant 0 : index
      %69 = vector.load %arg10[%c0_36, %c0_37] : memref<64x1xi32, #tpu.memory_space<vmem>>, vector<64x1xi32>
      %70 = vector.shape_cast %69 : vector<64x1xi32> to vector<1x64x1xi32>
      %c0_38 = arith.constant 0 : index
      %c0_39 = arith.constant 0 : index
      %c0_40 = arith.constant 0 : index
      %71 = vector.load %arg6[%c0_38, %c0_39, %c0_40] : memref<1x64x1xi32, #tpu.memory_space<vmem>>, vector<1x64x1xi32>
      tpu.vector_store %arg6[%c0_38, %c0_39, %c0_40], %70 {strides = array<i32>} : memref<1x64x1xi32, #tpu.memory_space<vmem>>, vector<1x64x1xi32>,
    } else {
    }
    %c0_i32_22 = arith.constant 0 : i32
    %39 = arith.cmpi eq, %arg1, %c0_i32_22 : i32
    %40 = arith.extui %39 : i1 to i32
    %c0_i32_23 = arith.constant 0 : i32
    %41 = arith.cmpi ne, %40, %c0_i32_23 : i32
    scf.if %41 {
      %cst_36 = arith.constant 0xFF800000 : f32
      %69 = vector.broadcast %cst_36 : f32 to vector<1x128xf32>
      %70 = arith.index_cast %arg2 : i32 to index
      %c0_37 = arith.constant 0 : index
      %c0_38 = arith.constant 0 : index
      %71 = vector.load %arg11[%70, %c0_37, %c0_38] : memref<1x1x128xf32, #tpu.memory_space<vmem>>, vector<1x1x128xf32>
      %72 = vector.shape_cast %71 : vector<1x1x128xf32> to vector<1x128xf32>
      %73 = vector.shape_cast %69 : vector<1x128xf32> to vector<1x1x128xf32>
      tpu.vector_store %arg11[%70, %c0_37, %c0_38], %73 {strides = array<i32>} : memref<1x1x128xf32, #tpu.memory_space<vmem>>, vector<1x1x128xf32>,
    } else {
    }
    %cst_24 = arith.constant dense<0xFF800000> : vector<128xf32>
    %42 = vector.multi_reduction <maximumf>, %4, %cst_24 [0] : vector<64x128xf32> to vector<128xf32>
    %43 = vector.shape_cast %42 : vector<128xf32> to vector<1x128xf32>
    %44 = vector.broadcast %43 : vector<1x128xf32> to vector<64x128xf32>
    %45 = arith.cmpf oeq, %4, %44 : vector<64x128xf32>
    %c1073741824_i32_25 = arith.constant 1073741824 : i32
    %46 = vector.broadcast %c1073741824_i32_25 : i32 to vector<64x128xi32>
    %47 = arith.select %45, %12, %46 : vector<64x128xi1>, vector<64x128xi32>
    %cst_26 = arith.constant dense<2147483647> : vector<128xi32>
    %48 = vector.multi_reduction <minsi>, %47, %cst_26 [0] : vector<64x128xi32> to vector<128xi32>
    %49 = vector.shape_cast %48 : vector<128xi32> to vector<1x128xi32>
    %c128_i32_27 = arith.constant 128 : i32
    %50 = arith.muli %arg2, %c128_i32_27 : i32
    %51 = tpu.assume_multiple %50, 128 : i32
    %52 = arith.index_cast %arg2 : i32 to index
    %c0_28 = arith.constant 0 : index
    %c0_29 = arith.constant 0 : index
    %53 = vector.load %arg11[%52, %c0_28, %c0_29] : memref<1x1x128xf32, #tpu.memory_space<vmem>>, vector<1x1x128xf32>
    %54 = vector.shape_cast %53 : vector<1x1x128xf32> to vector<1x128xf32>
    %c0_30 = arith.constant 0 : index
    %c0_31 = arith.constant 0 : index
    %55 = arith.index_cast %51 : i32 to index
    %56 = vector.load %arg7[%c0_30, %c0_31, %55] : memref<1x1x128xi32, #tpu.memory_space<vmem>>, vector<1x1x128xi32>
    %57 = vector.shape_cast %56 : vector<1x1x128xi32> to vector<1x128xi32>
    %58 = arith.cmpf ogt, %43, %54 : vector<1x128xf32>
    %59 = arith.select %58, %49, %57 : vector<1x128xi1>, vector<1x128xi32>
    %c0_32 = arith.constant 0 : index
    %c0_33 = arith.constant 0 : index
    %60 = arith.index_cast %51 : i32 to index
    %61 = vector.load %arg7[%c0_32, %c0_33, %60] : memref<1x1x128xi32, #tpu.memory_space<vmem>>, vector<1x1x128xi32>
    %62 = vector.shape_cast %61 : vector<1x1x128xi32> to vector<1x128xi32>
    %63 = vector.shape_cast %59 : vector<1x128xi32> to vector<1x1x128xi32>
    tpu.vector_store %arg7[%c0_32, %c0_33, %60], %63 {strides = array<i32>} : memref<1x1x128xi32, #tpu.memory_space<vmem>>, vector<1x1x128xi32>,
    %64 = arith.maximumf %54, %43 : vector<1x128xf32>
    %65 = arith.index_cast %arg2 : i32 to index
    %c0_34 = arith.constant 0 : index
    %c0_35 = arith.constant 0 : index
    %66 = vector.load %arg11[%65, %c0_34, %c0_35] : memref<1x1x128xf32, #tpu.memory_space<vmem>>, vector<1x1x128xf32>
    %67 = vector.shape_cast %66 : vector<1x1x128xf32> to vector<1x128xf32>
    %68 = vector.shape_cast %64 : vector<1x128xf32> to vector<1x1x128xf32>
    tpu.vector_store %arg11[%65, %c0_34, %c0_35], %68 {strides = array<i32>} : memref<1x1x128xf32, #tpu.memory_space<vmem>>, vector<1x1x128xf32>,
    return
  }
  func.func @transform_0(%arg0: i32, %arg1: i32, %arg2: i32, %arg3: i32) -> (i32, i32, i32) {
    %c0_i32 = arith.constant 0 : i32
    return %arg0, %arg1, %arg3 : i32, i32, i32
  }
  func.func @transform_1(%arg0: i32, %arg1: i32, %arg2: i32, %arg3: i32) -> (i32, i32, i32) {
    %c0_i32 = arith.constant 0 : i32
    return %arg0, %arg3, %arg2 : i32, i32, i32
  }
  func.func @transform_2(%arg0: i32, %arg1: i32, %arg2: i32, %arg3: i32) -> (i32, i32, i32) {
    %c0_i32 = arith.constant 0 : i32
    %c0_i32_0 = arith.constant 0 : i32
    return %arg0, %arg1, %c0_i32 : i32, i32, i32
  }
  func.func @transform_3(%arg0: i32, %arg1: i32, %arg2: i32, %arg3: i32) -> (i32, i32, i32) {
    %c0_i32 = arith.constant 0 : i32
    %c0_i32_0 = arith.constant 0 : i32
    %c0_i32_1 = arith.constant 0 : i32
    return %arg0, %c0_i32, %c0_i32_0 : i32, i32, i32
  }
}

</mosaic_0001>

<llo_original>
// kernel: neural_best_buddies.1
$region0: #{neural_best_buddies.1}
  #allocation0 [shape = 'u32[]', space=smem, size = 0x4, offset = 0x4, fixed_abs, tag = 'smem constant byte address 0x4 - core index']
  #allocation1 [shape = 'u32[144,128]{1,0:T(1,128)}', space=vmem, size = 0x12000, scoped, tag = 'internal scratch']
  #allocation2 [shape = 'f32[64,128]{1,0:T(8,128)}', space=vmem, size = 0x8000, scoped, tag = 'scratch operand']
  #allocation3 [shape = 'f32[64,1]{1,0:T(8,128)}', space=vmem, size = 0x8000, scoped, tag = 'scratch operand']
  #allocation4 [shape = 's32[64,1]{1,0:T(8,128)}', space=vmem, size = 0x8000, scoped, tag = 'scratch operand']
  #allocation5 [shape = 'f32[1,1,128]{2,1,0:T(1,128)}', space=vmem, size = 0x200, scoped, tag = 'scratch operand']
  %s0 = inlined_call_operand.vmem [shape: bf16[2,64,128], index: 0, kind: input, shape index: {}]
  %s1 = inlined_call_operand.vmem [shape: bf16[2,128,128], index: 1, kind: input, shape index: {}]
  %s2 = inlined_call_operand.vmem [shape: s32[2,64,1], index: 2, kind: output, shape index: {0}]
  %s3 = inlined_call_operand.vmem [shape: s32[2,1,128], index: 3, kind: output, shape index: {1}]
  %4 = xla_tuple %s2, %s3
  %s5 = sld [smem:[#allocation0]]
  $region61: #{neural_best_buddies.1} parent=0
    _
  %s7 = ssub.s32 1, %s5
  %s8 = scalar_select 0, %s7, %s5
  loop: start=0, step=1, limit=4
  $region2: #{neural_best_buddies.1} parent=0 // loop_pre_header
    _
  $region3: #{neural_best_buddies.1} parent=0 // loop_header
    %s10 = sphi 0, %s14
    %p11 = scmp.ge.s32.totalorder %s10, 4
    %s17 = sphi 0, %s43
    %s18 = sphi 0, %s39
    %s19 = sphi 0, %s35
    %s20 = sphi 0, %s31
    %s21 = sphi 0, %s17
    %s22 = sphi 0, %s18
    %s23 = sphi 0, %s19
    %s24 = sphi 0, %s20
    %s25 = sphi 0, %s21
    %s26 = sphi 0, %s22
    %s27 = sphi 0, %s23
    %s28 = sphi 0, %s24
    %s50 = sphi 0, %s52
    %s53 = sphi 0, %s50
    %s54 = sphi 0, %s53
    %s70 = sphi 0, %s54
    %s80 = sphi 0, %s82
    %s83 = sphi 0, %s80
    %s84 = sphi 0, %s83
    %s100 = sphi 0, %s84
    %s108 = sphi 0, %s110
    %s111 = sphi 0, %s108
    %s112 = sphi 0, %s111
    %s128 = sphi 0, %s112
    %s134 = sphi 0, %s136
    %s137 = sphi 0, %s134
    %s138 = sphi 0, %s137
    %s154 = sphi 0, %s138
  $region4: #{neural_best_buddies.1} parent=0 // loop_header_branch
    %13 = sbr.rel (%p11) target = $region8
  $region5: #{neural_best_buddies.1} parent=0 // loop_body
    %s15 = ssub.s32 %s10, 1
    %s16 = ssub.s32 %s10, 2
    %s29 = sadd.s32 1, %s20
    %p30 = scmp.ge.s32.totalorder %s29, 1
    %s31 = scalar_select %p30, 0, %s29
    %s32 = sadd.s32 1, %s19
    %s33 = scalar_select %p30, %s32, %s19
    %p34 = scmp.ge.s32.totalorder %s33, 1
    %s35 = scalar_select %p34, 0, %s33
    %s36 = sadd.s32 1, %s18
    %s37 = scalar_select %p34, %s36, %s18
    %p38 = scmp.ge.s32.totalorder %s37, 1
    %s39 = scalar_select %p38, 0, %s37
    %s40 = sadd.s32 1, %s17
    %s41 = scalar_select %p38, %s40, %s17
    %p42 = scmp.ge.s32.totalorder %s41, 2
    %s43 = scalar_select %p42, 0, %s41
    %s44 = ssub.s32 %s17, %s43
    %s45 = ssub.s32 %s18, %s39
    %s46 = sor.u32 %s44, %s45
    %s47 = ssub.s32 %s20, %s31
    %s48 = sor.u32 %s46, %s47
    %p49 = scmp.eq.s32.totalorder %s48, 0
    %s51 = sadd.s32 %s50, 1
    %s52 = scalar_select %p49, %s50, %s51
    %p55 = pneg %p49
    %p56 = scmp.eq.s32.totalorder %s10, 1
    %p57 = por %p55, %p56
    %p58 = scmp.ne.s32.totalorder %s50, %s53
    %p59 = scmp.eq.s32.totalorder %s10, 0
    %p60 = por %p58, %p59
    %p61 = scmp.ne.s32.totalorder %s50, %s53
    %p62 = scmp.eq.s32.totalorder %s15, 1
    %p63 = por %p61, %p62
    %p64 = scmp.ne.s32.totalorder %s53, %s54
    %p65 = scmp.eq.s32.totalorder %s15, 0
    %p66 = por %p64, %p65
    %p67 = scmp.ne.s32.totalorder %s53, %s54
    %p68 = scmp.eq.s32.totalorder %s16, 1
    %p69 = por %p67, %p68
    %p71 = scmp.ne.s32.totalorder %s54, %s70
    %p72 = scmp.eq.s32.totalorder %s16, 0
    %p73 = por %p71, %p72
    %s74 = ssub.s32 %s17, %s43
    %s75 = ssub.s32 %s20, %s31
    %s76 = sor.u32 %s74, %s75
    %s77 = ssub.s32 %s19, %s35
    %s78 = sor.u32 %s76, %s77
    %p79 = scmp.eq.s32.totalorder %s78, 0
    %s81 = sadd.s32 %s80, 1
    %s82 = scalar_select %p79, %s80, %s81
    %p85 = pneg %p79
    %p86 = scmp.eq.s32.totalorder %s10, 1
    %p87 = por %p85, %p86
    %p88 = scmp.ne.s32.totalorder %s80, %s83
    %p89 = scmp.eq.s32.totalorder %s10, 0
    %p90 = por %p88, %p89
    %p91 = scmp.ne.s32.totalorder %s80, %s83
    %p92 = scmp.eq.s32.totalorder %s15, 1
    %p93 = por %p91, %p92
    %p94 = scmp.ne.s32.totalorder %s83, %s84
    %p95 = scmp.eq.s32.totalorder %s15, 0
    %p96 = por %p94, %p95
    %p97 = scmp.ne.s32.totalorder %s83, %s84
    %p98 = scmp.eq.s32.totalorder %s16, 1
    %p99 = por %p97, %p98
    %p101 = scmp.ne.s32.totalorder %s84, %s100
    %p102 = scmp.eq.s32.totalorder %s16, 0
    %p103 = por %p101, %p102
    %s104 = ssub.s32 %s17, %s43
    %s105 = ssub.s32 %s18, %s39
    %s106 = sor.u32 %s104, %s105
    %p107 = scmp.eq.s32.totalorder %s106, 0
    %s109 = sadd.s32 %s108, 1
    %s110 = scalar_select %p107, %s108, %s109
    %p113 = pneg %p107
    %p114 = scmp.eq.s32.totalorder %s10, 1
    %p115 = por %p113, %p114
    %p116 = scmp.ne.s32.totalorder %s108, %s111
    %p117 = scmp.eq.s32.totalorder %s10, 0
    %p118 = por %p116, %p117
    %p119 = scmp.ne.s32.totalorder %s108, %s111
    %p120 = scmp.eq.s32.totalorder %s15, 1
    %p121 = por %p119, %p120
    %p122 = scmp.ne.s32.totalorder %s111, %s112
    %p123 = scmp.eq.s32.totalorder %s15, 0
    %p124 = por %p122, %p123
    %p125 = scmp.ne.s32.totalorder %s111, %s112
    %p126 = scmp.eq.s32.totalorder %s16, 1
    %p127 = por %p125, %p126
    %p129 = scmp.ne.s32.totalorder %s112, %s128
    %p130 = scmp.eq.s32.totalorder %s16, 0
    %p131 = por %p129, %p130
    %s132 = ssub.s32 %s17, %s43
    %p133 = scmp.eq.s32.totalorder %s132, 0
    %s135 = sadd.s32 %s134, 1
    %s136 = scalar_select %p133, %s134, %s135
    %p139 = pneg %p133
    %p140 = scmp.eq.s32.totalorder %s10, 1
    %p141 = por %p139, %p140
    %p142 = scmp.ne.s32.totalorder %s134, %s137
    %p143 = scmp.eq.s32.totalorder %s10, 0
    %p144 = por %p142, %p143
    %p145 = scmp.ne.s32.totalorder %s134, %s137
    %p146 = scmp.eq.s32.totalorder %s15, 1
    %p147 = por %p145, %p146
    %p148 = scmp.ne.s32.totalorder %s137, %s138
    %p149 = scmp.eq.s32.totalorder %s15, 0
    %p150 = por %p148, %p149
    %p151 = scmp.ne.s32.totalorder %s137, %s138
    %p152 = scmp.eq.s32.totalorder %s16, 1
    %p153 = por %p151, %p152
    %p155 = scmp.ne.s32.totalorder %s138, %s154
    %p156 = scmp.eq.s32.totalorder %s16, 0
    %p157 = por %p155, %p156
    %p158 = scmp.le.s32.totalorder 1, %s10
    %p159 = scmp.lt.s32.totalorder %s10, 3
    %p160 = pnand %p158, %p159
    %p161 = pneg %p160
    // Predicated region
    $region9: #{neural_best_buddies.1} parent=5 // pred_check
      _
    $region10: #{neural_best_buddies.1} parent=5 // pred_check_branch
      %163 = sbr.rel (%p160) target = $region12
    $region11: #{neural_best_buddies.1} parent=5 // pred_region
      %s164 = ssub.s32 %s10, 1
    $region12: #{neural_best_buddies.1} parent=5 // pred_fallthru
      _
    %p165 = scmp.lt.s32.totalorder %s10, 2
    // Predicated region
    $region13: #{neural_best_buddies.1} parent=5 // pred_check
      %p166 = pneg %p165
    $region14: #{neural_best_buddies.1} parent=5 // pred_check_branch
      %168 = sbr.rel (%p166) target = $region16
    $region15: #{neural_best_buddies.1} parent=5 // pred_region
      // Predicated region
      $region17: #{neural_best_buddies.1} parent=15 // pred_check
        %p169 = pneg %p60
      $region18: #{neural_best_buddies.1} parent=15 // pred_check_branch
        %171 = sbr.rel (%p169) target = $region20
      $region19: #{neural_best_buddies.1} parent=15 // pred_region
        %s172 = smul.u32 8, %s18
        %p173 = scmp.lt.s32.totalorder %s17, 1
        %s174 = scalar_select %p173, %s17, 1
        %p175 = scmp.lt.s32.totalorder %s172, 7
        %s176 = scalar_select %p175, %s172, 7
        %p177 = scmp.lt.s32.totalorder %s20, 0
        %s178 = scalar_select %p177, %s20, 0
        %s179 = sadd.s32 %s178, %s176
        %s180 = smul.addr %s174, 8
        %s181 = sadd.s32 %s179, %s180
        %s182 = smul.addr %s181, 4
        %s183 = scalar_lea.vmem %s0, %s182
        %s184 = smul.u32 8, %s18
      $region20: #{neural_best_buddies.1} parent=15 // pred_fallthru
        _
      // Predicated region
      $region21: #{neural_best_buddies.1} parent=15 // pred_check
        %p185 = pneg %p90
      $region22: #{neural_best_buddies.1} parent=15 // pred_check_branch
        %187 = sbr.rel (%p185) target = $region24
      $region23: #{neural_best_buddies.1} parent=15 // pred_region
        %s188 = smul.u32 16, %s20
        %p189 = scmp.lt.s32.totalorder %s17, 1
        %s190 = scalar_select %p189, %s17, 1
        %p191 = scmp.lt.s32.totalorder %s188, 15
        %s192 = scalar_select %p191, %s188, 15
        %p193 = scmp.lt.s32.totalorder %s19, 0
        %s194 = scalar_select %p193, %s19, 0
        %s195 = sadd.s32 %s194, %s192
        %s196 = smul.addr %s190, 16
        %s197 = sadd.s32 %s195, %s196
        %s198 = smul.addr %s197, 4
        %s199 = scalar_lea.vmem %s1, %s198
        %s200 = smul.u32 16, %s20
      $region24: #{neural_best_buddies.1} parent=15 // pred_fallthru
        _
    $region16: #{neural_best_buddies.1} parent=5 // pred_fallthru
      _
    %p201 = scmp.le.s32.totalorder 1, %s10
    %p202 = scmp.lt.s32.totalorder %s10, 3
    %p203 = pnand %p201, %p202
    %p204 = pneg %p203
    // Predicated region
    $region25: #{neural_best_buddies.1} parent=5 // pred_check
      _
    $region26: #{neural_best_buddies.1} parent=5 // pred_check_branch
      %206 = sbr.rel (%p203) target = $region28
    $region27: #{neural_best_buddies.1} parent=5 // pred_region
      %s207 = ssub.s32 %s10, 1
      %s208 = smul.u32 8, %s22
      %p209 = scmp.lt.s32.totalorder %s21, 1
      %s210 = scalar_select %p209, %s21, 1
      %p211 = scmp.lt.s32.totalorder %s208, 7
      %s212 = scalar_select %p211, %s208, 7
      %p213 = scmp.lt.s32.totalorder %s24, 0
      %s214 = scalar_select %p213, %s24, 0
      %s215 = sadd.s32 %s214, %s212
      %s216 = smul.addr %s210, 8
      %s217 = sadd.s32 %s215, %s216
      %s218 = smul.addr %s217, 4
      %s219 = scalar_lea.vmem %s0, %s218
      %p220 = pneg %p66
      %p221 = pneg %p63
      %s222 = smul.u32 16, %s24
      %p223 = scmp.lt.s32.totalorder %s21, 1
      %s224 = scalar_select %p223, %s21, 1
      %p225 = scmp.lt.s32.totalorder %s222, 15
      %s226 = scalar_select %p225, %s222, 15
      %p227 = scmp.lt.s32.totalorder %s23, 0
      %s228 = scalar_select %p227, %s23, 0
      %s229 = sadd.s32 %s228, %s226
      %s230 = smul.addr %s224, 16
      %s231 = sadd.s32 %s229, %s230
      %s232 = smul.addr %s231, 4
      %s233 = scalar_lea.vmem %s1, %s232
      %p234 = pneg %p96
      %p235 = pneg %p93
      %p236 = pneg %p124
      %p237 = pneg %p121
      %s238 = smul.u32 8, %s22
      %p239 = scmp.lt.s32.totalorder %s21, 1
      %s240 = scalar_select %p239, %s21, 1
      %p241 = scmp.lt.s32.totalorder %s238, 7
      %s242 = scalar_select %p241, %s238, 7
      %s243 = smul.addr %s240, 8
      %s244 = sadd.s32 %s242, %s243
      %s245 = smul.addr %s244, 8
      %s246 = scalar_lea.vmem %s2, %s245
      %p247 = pneg %p150
      %p248 = pneg %p147
      %p249 = scmp.lt.s32.totalorder %s21, 1
      %s250 = scalar_select %p249, %s21, 1
      %s251 = scalar_lea.vmem %s3, %s250
      %s252 = smul.u32 8, %s22
      %p253 = scmp.lt.s32.totalorder %s21, 1
      %s254 = scalar_select %p253, %s21, 1
      %p255 = scmp.lt.s32.totalorder %s252, 7
      %s256 = scalar_select %p255, %s252, 7
      %p257 = scmp.lt.s32.totalorder %s24, 0
      %s258 = scalar_select %p257, %s24, 0
      %s259 = sadd.s32 %s258, %s256
      %s260 = smul.addr %s254, 8
      %s261 = sadd.s32 %s259, %s260
      %s262 = smul.addr %s261, 4
      %s263 = scalar_lea.vmem %s0, %s262
      %s264 = smul.u32 8, %s22
      %s265 = smul.u32 16, %s24
      %p266 = scmp.lt.s32.totalorder %s21, 1
      %s267 = scalar_select %p266, %s21, 1
      %p268 = scmp.lt.s32.totalorder %s265, 15
      %s269 = scalar_select %p268, %s265, 15
      %p270 = scmp.lt.s32.totalorder %s23, 0
      %s271 = scalar_select %p270, %s23, 0
      %s272 = sadd.s32 %s271, %s269
      %s273 = smul.addr %s267, 16
      %s274 = sadd.s32 %s272, %s273
      %s275 = smul.addr %s274, 4
      %s276 = scalar_lea.vmem %s1, %s275
      %s277 = smul.u32 16, %s24
      %s278 = smul.u32 8, %s22
      %p279 = scmp.lt.s32.totalorder %s21, 1
      %s280 = scalar_select %p279, %s21, 1
      %p281 = scmp.lt.s32.totalorder %s278, 7
      %s282 = scalar_select %p281, %s278, 7
      %s283 = smul.addr %s280, 8
      %s284 = sadd.s32 %s282, %s283
      %s285 = smul.addr %s284, 8
      %s286 = scalar_lea.vmem %s2, %s285
      %s287 = smul.u32 8, %s22
      %p288 = scmp.lt.s32.totalorder %s21, 1
      %s289 = scalar_select %p288, %s21, 1
      %s290 = scalar_lea.vmem %s3, %s289
      %v292 = vld [vmem:[%s263] sm:$0xf]
      %v293 = vld [vmem:[%s263 + $0x4] sm:$0xf]
      %v294 = vld [vmem:[%s263 + $0x8] sm:$0xf]
      %v295 = vld [vmem:[%s263 + $0xc] sm:$0xf]
      %v296 = vld [vmem:[%s263 + $0x10] sm:$0xf]
      %v297 = vld [vmem:[%s263 + $0x14] sm:$0xf]
      %v298 = vld [vmem:[%s263 + $0x18] sm:$0xf]
      %v299 = vld [vmem:[%s263 + $0x1c] sm:$0xf]
      %v300 = vld [vmem:[%s276] sm:$0xf]
      %v301 = vld [vmem:[%s276 + $0x4] sm:$0xf]
      %v302 = vld [vmem:[%s276 + $0x8] sm:$0xf]
      %v303 = vld [vmem:[%s276 + $0xc] sm:$0xf]
      %v304 = vld [vmem:[%s276 + $0x10] sm:$0xf]
      %v305 = vld [vmem:[%s276 + $0x14] sm:$0xf]
      %v306 = vld [vmem:[%s276 + $0x18] sm:$0xf]
      %v307 = vld [vmem:[%s276 + $0x1c] sm:$0xf]
      %v308 = vld [vmem:[%s276 + $0x20] sm:$0xf]
      %v309 = vld [vmem:[%s276 + $0x24] sm:$0xf]
      %v310 = vld [vmem:[%s276 + $0x28] sm:$0xf]
      %v311 = vld [vmem:[%s276 + $0x2c] sm:$0xf]
      %v312 = vld [vmem:[%s276 + $0x30] sm:$0xf]
      %v313 = vld [vmem:[%s276 + $0x34] sm:$0xf]
      %v314 = vld [vmem:[%s276 + $0x38] sm:$0xf]
      %v315 = vld [vmem:[%s276 + $0x3c] sm:$0xf]
      %v324 = vunpack.c.l.b16 %v292
      %v325 = vunpack.c.l.b16 %v293
      %v326 = vunpack.c.l.b16 %v294
      %v327 = vunpack.c.l.b16 %v295
      %v328 = vunpack.c.l.b16 %v296
      %v329 = vunpack.c.l.b16 %v297
      %v330 = vunpack.c.l.b16 %v298
      %v331 = vunpack.c.l.b16 %v299
      %v332 = vpack.c.b16 %v325, %v324
      %v333 = vpack.c.b16 %v327, %v326
      %v334 = vpack.c.b16 %v329, %v328
      %v335 = vpack.c.b16 %v331, %v330
      %v356 = vunpack.c.l.b16 %v300
      %v357 = vunpack.c.l.b16 %v301
      %v358 = vunpack.c.l.b16 %v302
      %v359 = vunpack.c.l.b16 %v303
      %v360 = vunpack.c.l.b16 %v304
      %v361 = vunpack.c.l.b16 %v305
      %v362 = vunpack.c.l.b16 %v306
      %v363 = vunpack.c.l.b16 %v307
      %v364 = vunpack.c.l.b16 %v308
      %v365 = vunpack.c.l.b16 %v309
      %v366 = vunpack.c.l.b16 %v310
      %v367 = vunpack.c.l.b16 %v311
      %v368 = vunpack.c.l.b16 %v312
      %v369 = vunpack.c.l.b16 %v313
      %v370 = vunpack.c.l.b16 %v314
      %v371 = vunpack.c.l.b16 %v315
      %v372 = vpack.c.b16 %v357, %v356
      %v373 = vpack.c.b16 %v359, %v358
      %v374 = vpack.c.b16 %v361, %v360
      %v375 = vpack.c.b16 %v363, %v362
      %v376 = vpack.c.b16 %v365, %v364
      %v377 = vpack.c.b16 %v367, %v366
      %v378 = vpack.c.b16 %v369, %v368
      %v379 = vpack.c.b16 %v371, %v370
      %388 = vmatprep.subr.bf16.mxu0 0
      %389 = vmatpush1.bf16.msra.mxu0 %v372
      %390 = vmatprep.subr.bf16.mxu0 0
      %391 = vmatpush1.bf16.msra.mxu0 %v373
      %392 = vmatprep.subr.bf16.mxu0 0
      %393 = vmatpush1.bf16.msra.mxu0 %v374
      %394 = vmatprep.subr.bf16.mxu0 0
      %395 = vmatpush1.bf16.msra.mxu0 %v375
      %396 = vmatprep.subr.bf16.mxu0 0
      %397 = vmatpush1.bf16.msra.mxu0 %v376
      %398 = vmatprep.subr.bf16.mxu0 0
      %399 = vmatpush1.bf16.msra.mxu0 %v377
      %400 = vmatprep.subr.bf16.mxu0 0
      %401 = vmatpush1.bf16.msra.mxu0 %v378
      %402 = vmatprep.subr.bf16.mxu0 0
      %403 = vmatpush1.bf16.msra.mxu0 %v379
      %404 = vmatprep.subr.bf16.mxu0 0
      %405 = vmatpush1.bf16.msra.mxu0 0
      %406 = vmatprep.subr.bf16.mxu0 0
      %407 = vmatpush1.bf16.msra.mxu0 0
      %408 = vmatprep.subr.bf16.mxu0 0
      %409 = vmatpush1.bf16.msra.mxu0 0
      %410 = vmatprep.subr.bf16.mxu0 0
      %411 = vmatpush1.bf16.msra.mxu0 0
      %412 = vmatprep.subr.bf16.mxu0 0
      %413 = vmatpush1.bf16.msra.mxu0 0
      %414 = vmatprep.subr.bf16.mxu0 0
      %415 = vmatpush1.bf16.msra.mxu0 0
      %416 = vmatprep.subr.bf16.mxu0 0
      %417 = vmatpush1.bf16.msra.mxu0 0
      %418 = vmatprep.subr.bf16.mxu0 0
      %419 = vmatpush1.bf16.msra.mxu0 0
      %420 = vmatprep.mubr.bf16.mxu0 0
      %421 = vmatmul.mubr.bf16.gmra.mrb[0].mxu0 %v332
      %v422 = vpop.f32.mrb[0].mxu0
      %v423 = vadd.f32 0.0, %v422
      %v424 = vpop.f32.mrb[0].mxu0
      %v425 = vpop.f32.mrb[0].mxu0
      %v426 = vadd.f32 0.0, %v425
      %v427 = vpop.f32.mrb[0].mxu0
      %428 = vmatprep.mubr.bf16.mxu0 0
      %429 = vmatmul.mubr.bf16.gmra.mrb[0].mxu0 %v333
      %v430 = vpop.f32.mrb[0].mxu0
      %v431 = vadd.f32 0.0, %v430
      %v432 = vpop.f32.mrb[0].mxu0
      %v433 = vpop.f32.mrb[0].mxu0
      %v434 = vadd.f32 0.0, %v433
      %v435 = vpop.f32.mrb[0].mxu0
      %436 = vmatprep.mubr.bf16.mxu0 0
      %437 = vmatmul.mubr.bf16.gmra.mrb[0].mxu0 %v334
      %v438 = vpop.f32.mrb[0].mxu0
      %v439 = vadd.f32 0.0, %v438
      %v440 = vpop.f32.mrb[0].mxu0
      %v441 = vpop.f32.mrb[0].mxu0
      %v442 = vadd.f32 0.0, %v441
      %v443 = vpop.f32.mrb[0].mxu0
      %444 = vmatprep.mubr.bf16.mxu0 0
      %445 = vmatmul.mubr.bf16.gmra.mrb[0].mxu0 %v335
      %v446 = vpop.f32.mrb[0].mxu0
      %v447 = vadd.f32 0.0, %v446
      %v448 = vpop.f32.mrb[0].mxu0
      %v449 = vpop.f32.mrb[0].mxu0
      %v450 = vadd.f32 0.0, %v449
      %v451 = vpop.f32.mrb[0].mxu0
      %452 = vdwg.mxu0
      %v453 = vlaneseq
      %v454 = vand.u32 %v453, 127
      %s455 = smul.u32 %s23, 128
      %v456 = vstv %s455
      %v457 = vadd.s32 %v454, %v456
      %v458 = vlaneseq
      %v459 = vshrl.u32 %v458, 7
      %v460 = vadd.s32 %v459, 8
      %v461 = vadd.s32 %v459, 16
      %v462 = vadd.s32 %v459, 24
      %v463 = vadd.s32 %v459, 32
      %v464 = vadd.s32 %v459, 40
      %v465 = vadd.s32 %v459, 48
      %v466 = vadd.s32 %v459, 56
      %s467 = smul.u32 %s22, 64
      %v468 = vstv %s467
      %v469 = vadd.s32 %v459, %v468
      %v470 = vadd.s32 %v460, %v468
      %v471 = vadd.s32 %v461, %v468
      %v472 = vadd.s32 %v462, %v468
      %v473 = vadd.s32 %v463, %v468
      %v474 = vadd.s32 %v464, %v468
      %v475 = vadd.s32 %v465, %v468
      %v476 = vadd.s32 %v466, %v468
      %p477 = scmp.eq.s32.totalorder %s23, 0
      // Predicated region
      $region29: #{neural_best_buddies.1} parent=27 // pred_check
        %p478 = pneg %p477
      $region30: #{neural_best_buddies.1} parent=27 // pred_check_branch
        %480 = sbr.rel (%p478) target = $region32
      $region31: #{neural_best_buddies.1} parent=27 // pred_region
        %vm481 = vcmask 7168
        %482 = vst.msk [vmem:[#allocation3] sm:$0xff] %vm481, -inf
        %483 = vst.msk [vmem:[#allocation3 + $0x8] sm:$0xff] %vm481, -inf
        %484 = vst.msk [vmem:[#allocation3 + $0x10] sm:$0xff] %vm481, -inf
        %485 = vst.msk [vmem:[#allocation3 + $0x18] sm:$0xff] %vm481, -inf
        %486 = vst.msk [vmem:[#allocation3 + $0x20] sm:$0xff] %vm481, -inf
        %487 = vst.msk [vmem:[#allocation3 + $0x28] sm:$0xff] %vm481, -inf
        %488 = vst.msk [vmem:[#allocation3 + $0x30] sm:$0xff] %vm481, -inf
        %489 = vst.msk [vmem:[#allocation3 + $0x38] sm:$0xff] %vm481, -inf
        %490 = vst.msk [vmem:[#allocation4] sm:$0xff] %vm481, 0
        %491 = vst.msk [vmem:[#allocation4 + $0x8] sm:$0xff] %vm481, 0
        %492 = vst.msk [vmem:[#allocation4 + $0x10] sm:$0xff] %vm481, 0
        %493 = vst.msk [vmem:[#allocation4 + $0x18] sm:$0xff] %vm481, 0
        %494 = vst.msk [vmem:[#allocation4 + $0x20] sm:$0xff] %vm481, 0
        %495 = vst.msk [vmem:[#allocation4 + $0x28] sm:$0xff] %vm481, 0
        %496 = vst.msk [vmem:[#allocation4 + $0x30] sm:$0xff] %vm481, 0
        %497 = vst.msk [vmem:[#allocation4 + $0x38] sm:$0xff] %vm481, 0
      $region32: #{neural_best_buddies.1} parent=27 // pred_fallthru
        _
      %vm498 = vcmp.lt.s32.totalorder %v457, 64
      %v499 = vsel %vm498, %v423, -inf
      %v500 = vsel %vm498, %v426, -inf
      %v501 = vsel %vm498, %v431, -inf
      %v502 = vsel %vm498, %v434, -inf
      %v503 = vsel %vm498, %v439, -inf
      %v504 = vsel %vm498, %v442, -inf
      %v505 = vsel %vm498, %v447, -inf
      %v506 = vsel %vm498, %v450, -inf
      %507 = vmax.xlane.f32.xlu0 %v499
      %v508 = vpop.xlane.xlu0 %507
      %509 = vmax.xlane.f32.xlu0 %v500
      %v510 = vpop.xlane.xlu0 %509
      %511 = vmax.xlane.f32.xlu0 %v501
      %v512 = vpop.xlane.xlu0 %511
      %513 = vmax.xlane.f32.xlu0 %v502
      %v514 = vpop.xlane.xlu0 %513
      %515 = vmax.xlane.f32.xlu0 %v503
      %v516 = vpop.xlane.xlu0 %515
      %517 = vmax.xlane.f32.xlu0 %v504
      %v518 = vpop.xlane.xlu0 %517
      %519 = vmax.xlane.f32.xlu0 %v505
      %v520 = vpop.xlane.xlu0 %519
      %521 = vmax.xlane.f32.xlu0 %v506
      %v522 = vpop.xlane.xlu0 %521
      %vm523 = vcmp.eq.f32.partialorder %v499, %v508
      %vm524 = vcmp.eq.f32.partialorder %v500, %v510
      %vm525 = vcmp.eq.f32.partialorder %v501, %v512
      %vm526 = vcmp.eq.f32.partialorder %v502, %v514
      %vm527 = vcmp.eq.f32.partialorder %v503, %v516
      %vm528 = vcmp.eq.f32.partialorder %v504, %v518
      %vm529 = vcmp.eq.f32.partialorder %v505, %v520
      %vm530 = vcmp.eq.f32.partialorder %v506, %v522
      %v531 = vsel %vm523, %v457, 1073741824
      %v532 = vsel %vm524, %v457, 1073741824
      %v533 = vsel %vm525, %v457, 1073741824
      %v534 = vsel %vm526, %v457, 1073741824
      %v535 = vsel %vm527, %v457, 1073741824
      %v536 = vsel %vm528, %v457, 1073741824
      %v537 = vsel %vm529, %v457, 1073741824
      %v538 = vsel %vm530, %v457, 1073741824
      %v539 = vand.u32 %v531, 65535
      %v540 = vshra.s32 %v531, 16
      %v541 = vcvt.s32.f32 %v539
      %v542 = vcvt.s32.f32 %v540
      %543 = vmin.xlane.f32.xlu0 %v542
      %v544 = vpop.xlane.xlu0 %543
      %vm545 = vcmp.eq.f32.partialorder %v542, %v544
      %v546 = vsel %vm545, %v541, inf
      %547 = vmin.xlane.f32.xlu0 %v546
      %v548 = vpop.xlane.xlu0 %547
      %v549 = vcvt.f32.s32 %v548
      %v550 = vcvt.f32.s32 %v544
      %v551 = vshll.u32 %v550, 16
      %v552 = vadd.s32 %v551, %v549
      %v553 = vand.u32 %v532, 65535
      %v554 = vshra.s32 %v532, 16
      %v555 = vcvt.s32.f32 %v553
      %v556 = vcvt.s32.f32 %v554
      %557 = vmin.xlane.f32.xlu0 %v556
      %v558 = vpop.xlane.xlu0 %557
      %vm559 = vcmp.eq.f32.partialorder %v556, %v558
      %v560 = vsel %vm559, %v555, inf
      %561 = vmin.xlane.f32.xlu0 %v560
      %v562 = vpop.xlane.xlu0 %561
      %v563 = vcvt.f32.s32 %v562
      %v564 = vcvt.f32.s32 %v558
      %v565 = vshll.u32 %v564, 16
      %v566 = vadd.s32 %v565, %v563
      %v567 = vand.u32 %v533, 65535
      %v568 = vshra.s32 %v533, 16
      %v569 = vcvt.s32.f32 %v567
      %v570 = vcvt.s32.f32 %v568
      %571 = vmin.xlane.f32.xlu0 %v570
      %v572 = vpop.xlane.xlu0 %571
      %vm573 = vcmp.eq.f32.partialorder %v570, %v572
      %v574 = vsel %vm573, %v569, inf
      %575 = vmin.xlane.f32.xlu0 %v574
      %v576 = vpop.xlane.xlu0 %575
      %v577 = vcvt.f32.s32 %v576
      %v578 = vcvt.f32.s32 %v572
      %v579 = vshll.u32 %v578, 16
      %v580 = vadd.s32 %v579, %v577
      %v581 = vand.u32 %v534, 65535
      %v582 = vshra.s32 %v534, 16
      %v583 = vcvt.s32.f32 %v581
      %v584 = vcvt.s32.f32 %v582
      %585 = vmin.xlane.f32.xlu0 %v584
      %v586 = vpop.xlane.xlu0 %585
      %vm587 = vcmp.eq.f32.partialorder %v584, %v586
      %v588 = vsel %vm587, %v583, inf
      %589 = vmin.xlane.f32.xlu0 %v588
      %v590 = vpop.xlane.xlu0 %589
      %v591 = vcvt.f32.s32 %v590
      %v592 = vcvt.f32.s32 %v586
      %v593 = vshll.u32 %v592, 16
      %v594 = vadd.s32 %v593, %v591
      %v595 = vand.u32 %v535, 65535
      %v596 = vshra.s32 %v535, 16
      %v597 = vcvt.s32.f32 %v595
      %v598 = vcvt.s32.f32 %v596
      %599 = vmin.xlane.f32.xlu0 %v598
      %v600 = vpop.xlane.xlu0 %599
      %vm601 = vcmp.eq.f32.partialorder %v598, %v600
      %v602 = vsel %vm601, %v597, inf
      %603 = vmin.xlane.f32.xlu0 %v602
      %v604 = vpop.xlane.xlu0 %603
      %v605 = vcvt.f32.s32 %v604
      %v606 = vcvt.f32.s32 %v600
      %v607 = vshll.u32 %v606, 16
      %v608 = vadd.s32 %v607, %v605
      %v609 = vand.u32 %v536, 65535
      %v610 = vshra.s32 %v536, 16
      %v611 = vcvt.s32.f32 %v609
      %v612 = vcvt.s32.f32 %v610
      %613 = vmin.xlane.f32.xlu0 %v612
      %v614 = vpop.xlane.xlu0 %613
      %vm615 = vcmp.eq.f32.partialorder %v612, %v614
      %v616 = vsel %vm615, %v611, inf
      %617 = vmin.xlane.f32.xlu0 %v616
      %v618 = vpop.xlane.xlu0 %617
      %v619 = vcvt.f32.s32 %v618
      %v620 = vcvt.f32.s32 %v614
      %v621 = vshll.u32 %v620, 16
      %v622 = vadd.s32 %v621, %v619
      %v623 = vand.u32 %v537, 65535
      %v624 = vshra.s32 %v537, 16
      %v625 = vcvt.s32.f32 %v623
      %v626 = vcvt.s32.f32 %v624
      %627 = vmin.xlane.f32.xlu0 %v626
      %v628 = vpop.xlane.xlu0 %627
      %vm629 = vcmp.eq.f32.partialorder %v626, %v628
      %v630 = vsel %vm629, %v625, inf
      %631 = vmin.xlane.f32.xlu0 %v630
      %v632 = vpop.xlane.xlu0 %631
      %v633 = vcvt.f32.s32 %v632
      %v634 = vcvt.f32.s32 %v628
      %v635 = vshll.u32 %v634, 16
      %v636 = vadd.s32 %v635, %v633
      %v637 = vand.u32 %v538, 65535
      %v638 = vshra.s32 %v538, 16
      %v639 = vcvt.s32.f32 %v637
      %v640 = vcvt.s32.f32 %v638
      %641 = vmin.xlane.f32.xlu0 %v640
      %v642 = vpop.xlane.xlu0 %641
      %vm643 = vcmp.eq.f32.partialorder %v640, %v642
      %v644 = vsel %vm643, %v639, inf
      %645 = vmin.xlane.f32.xlu0 %v644
      %v646 = vpop.xlane.xlu0 %645
      %v647 = vcvt.f32.s32 %v646
      %v648 = vcvt.f32.s32 %v642
      %v649 = vshll.u32 %v648, 16
      %v650 = vadd.s32 %v649, %v647
      %v651 = vld [vmem:[#allocation3] sm:$0xff]
      %v652 = vld [vmem:[#allocation3 + $0x8] sm:$0xff]
      %v653 = vld [vmem:[#allocation3 + $0x10] sm:$0xff]
      %v654 = vld [vmem:[#allocation3 + $0x18] sm:$0xff]
      %v655 = vld [vmem:[#allocation3 + $0x20] sm:$0xff]
      %v656 = vld [vmem:[#allocation3 + $0x28] sm:$0xff]
      %v657 = vld [vmem:[#allocation3 + $0x30] sm:$0xff]
      %v658 = vld [vmem:[#allocation3 + $0x38] sm:$0xff]
      %vm659 = vcmp.gt.f32.partialorder %v508, %v651
      %vm660 = vcmp.gt.f32.partialorder %v510, %v652
      %vm661 = vcmp.gt.f32.partialorder %v512, %v653
      %vm662 = vcmp.gt.f32.partialorder %v514, %v654
      %vm663 = vcmp.gt.f32.partialorder %v516, %v655
      %vm664 = vcmp.gt.f32.partialorder %v518, %v656
      %vm665 = vcmp.gt.f32.partialorder %v520, %v657
      %vm666 = vcmp.gt.f32.partialorder %v522, %v658
      %v667 = vld [vmem:[#allocation4] sm:$0xff]
      %v668 = vld [vmem:[#allocation4 + $0x8] sm:$0xff]
      %v669 = vld [vmem:[#allocation4 + $0x10] sm:$0xff]
      %v670 = vld [vmem:[#allocation4 + $0x18] sm:$0xff]
      %v671 = vld [vmem:[#allocation4 + $0x20] sm:$0xff]
      %v672 = vld [vmem:[#allocation4 + $0x28] sm:$0xff]
      %v673 = vld [vmem:[#allocation4 + $0x30] sm:$0xff]
      %v674 = vld [vmem:[#allocation4 + $0x38] sm:$0xff]
      %v675 = vsel %vm659, %v552, %v667
      %v676 = vsel %vm660, %v566, %v668
      %v677 = vsel %vm661, %v580, %v669
      %v678 = vsel %vm662, %v594, %v670
      %v679 = vsel %vm663, %v608, %v671
      %v680 = vsel %vm664, %v622, %v672
      %v681 = vsel %vm665, %v636, %v673
      %v682 = vsel %vm666, %v650, %v674
      %vm683 = vcmask 7168
      %684 = vst.msk [vmem:[#allocation4] sm:$0xff] %vm683, %v675
      %685 = vst.msk [vmem:[#allocation4 + $0x8] sm:$0xff] %vm683, %v676
      %686 = vst.msk [vmem:[#allocation4 + $0x10] sm:$0xff] %vm683, %v677
      %687 = vst.msk [vmem:[#allocation4 + $0x18] sm:$0xff] %vm683, %v678
      %688 = vst.msk [vmem:[#allocation4 + $0x20] sm:$0xff] %vm683, %v679
      %689 = vst.msk [vmem:[#allocation4 + $0x28] sm:$0xff] %vm683, %v680
      %690 = vst.msk [vmem:[#allocation4 + $0x30] sm:$0xff] %vm683, %v681
      %691 = vst.msk [vmem:[#allocation4 + $0x38] sm:$0xff] %vm683, %v682
      %v692 = vld [vmem:[#allocation3] sm:$0xff]
      %v693 = vld [vmem:[#allocation3 + $0x8] sm:$0xff]
      %v694 = vld [vmem:[#allocation3 + $0x10] sm:$0xff]
      %v695 = vld [vmem:[#allocation3 + $0x18] sm:$0xff]
      %v696 = vld [vmem:[#allocation3 + $0x20] sm:$0xff]
      %v697 = vld [vmem:[#allocation3 + $0x28] sm:$0xff]
      %v698 = vld [vmem:[#allocation3 + $0x30] sm:$0xff]
      %v699 = vld [vmem:[#allocation3 + $0x38] sm:$0xff]
      %v700 = vmax.f32 %v692, %v508
      %v701 = vmax.f32 %v693, %v510
      %v702 = vmax.f32 %v694, %v512
      %v703 = vmax.f32 %v695, %v514
      %v704 = vmax.f32 %v696, %v516
      %v705 = vmax.f32 %v697, %v518
      %v706 = vmax.f32 %v698, %v520
      %v707 = vmax.f32 %v699, %v522
      %708 = vst.msk [vmem:[#allocation3] sm:$0xff] %vm683, %v700
      %709 = vst.msk [vmem:[#allocation3 + $0x8] sm:$0xff] %vm683, %v701
      %710 = vst.msk [vmem:[#allocation3 + $0x10] sm:$0xff] %vm683, %v702
      %711 = vst.msk [vmem:[#allocation3 + $0x18] sm:$0xff] %vm683, %v703
      %712 = vst.msk [vmem:[#allocation3 + $0x20] sm:$0xff] %vm683, %v704
      %713 = vst.msk [vmem:[#allocation3 + $0x28] sm:$0xff] %vm683, %v705
      %714 = vst.msk [vmem:[#allocation3 + $0x30] sm:$0xff] %vm683, %v706
      %715 = vst.msk [vmem:[#allocation3 + $0x38] sm:$0xff] %vm683, %v707
      // Predicated region
      $region33: #{neural_best_buddies.1} parent=27 // pred_check
        %p716 = pneg %p477
      $region34: #{neural_best_buddies.1} parent=27 // pred_check_branch
        %718 = sbr.rel (%p716) target = $region36
      $region35: #{neural_best_buddies.1} parent=27 // pred_region
        %v719 = vld [vmem:[#allocation4] sm:$0xff]
        %v720 = vld [vmem:[#allocation4 + $0x8] sm:$0xff]
        %v721 = vld [vmem:[#allocation4 + $0x10] sm:$0xff]
        %v722 = vld [vmem:[#allocation4 + $0x18] sm:$0xff]
        %v723 = vld [vmem:[#allocation4 + $0x20] sm:$0xff]
        %v724 = vld [vmem:[#allocation4 + $0x28] sm:$0xff]
        %v725 = vld [vmem:[#allocation4 + $0x30] sm:$0xff]
        %v726 = vld [vmem:[#allocation4 + $0x38] sm:$0xff]
        %727 = vst.msk [vmem:[%s286] sm:$0xff] %vm683, %v719
        %728 = vst.msk [vmem:[%s286 + $0x8] sm:$0xff] %vm683, %v720
        %729 = vst.msk [vmem:[%s286 + $0x10] sm:$0xff] %vm683, %v721
        %730 = vst.msk [vmem:[%s286 + $0x18] sm:$0xff] %vm683, %v722
        %731 = vst.msk [vmem:[%s286 + $0x20] sm:$0xff] %vm683, %v723
        %732 = vst.msk [vmem:[%s286 + $0x28] sm:$0xff] %vm683, %v724
        %733 = vst.msk [vmem:[%s286 + $0x30] sm:$0xff] %vm683, %v725
        %734 = vst.msk [vmem:[%s286 + $0x38] sm:$0xff] %vm683, %v726
      $region36: #{neural_best_buddies.1} parent=27 // pred_fallthru
        _
      %p735 = scmp.eq.s32.totalorder %s22, 0
      // Predicated region
      $region37: #{neural_best_buddies.1} parent=27 // pred_check
        %p736 = pneg %p735
      $region38: #{neural_best_buddies.1} parent=27 // pred_check_branch
        %738 = sbr.rel (%p736) target = $region40
      $region39: #{neural_best_buddies.1} parent=27 // pred_region
        %s739 = scalar_lea.vmem [#allocation5], %s23
        %740 = vst [vmem:[%s739] sm:$0x1] -inf
      $region40: #{neural_best_buddies.1} parent=27 // pred_fallthru
        _
      %v741 = vmax.f32 %v423, %v439
      %v742 = vmax.f32 %v426, %v442
      %v743 = vmax.f32 %v431, %v447
      %v744 = vmax.f32 %v434, %v450
      %v745 = vmax.f32 %v741, %v742
      %v746 = vmax.f32 %v743, %v744
      %v747 = vmax.f32 %v745, %v746
      %v748 = vrot.slane %v747, 4
      %v749 = vmax.f32 %v747, %v748
      %v750 = vrot.slane %v749, 2
      %v751 = vmax.f32 %v749, %v750
      %v752 = vrot.slane %v751, 1
      %v753 = vmax.f32 %v751, %v752
      %vm754 = vcmp.eq.f32.partialorder %v423, %v753
      %vm755 = vcmp.eq.f32.partialorder %v426, %v753
      %vm756 = vcmp.eq.f32.partialorder %v431, %v753
      %vm757 = vcmp.eq.f32.partialorder %v434, %v753
      %vm758 = vcmp.eq.f32.partialorder %v439, %v753
      %vm759 = vcmp.eq.f32.partialorder %v442, %v753
      %vm760 = vcmp.eq.f32.partialorder %v447, %v753
      %vm761 = vcmp.eq.f32.partialorder %v450, %v753
      %v762 = vsel %vm754, %v469, 1073741824
      %v763 = vsel %vm755, %v470, 1073741824
      %v764 = vsel %vm756, %v471, 1073741824
      %v765 = vsel %vm757, %v472, 1073741824
      %v766 = vsel %vm758, %v473, 1073741824
      %v767 = vsel %vm759, %v474, 1073741824
      %v768 = vsel %vm760, %v475, 1073741824
      %v769 = vsel %vm761, %v476, 1073741824
      %vm770 = vcmp.lt.s32.totalorder %v762, %v766
      %v771 = vsel %vm770, %v762, %v766
      %vm772 = vcmp.lt.s32.totalorder %v763, %v767
      %v773 = vsel %vm772, %v763, %v767
      %vm774 = vcmp.lt.s32.totalorder %v764, %v768
      %v775 = vsel %vm774, %v764, %v768
      %vm776 = vcmp.lt.s32.totalorder %v765, %v769
      %v777 = vsel %vm776, %v765, %v769
      %vm778 = vcmp.lt.s32.totalorder %v771, %v773
      %v779 = vsel %vm778, %v771, %v773
      %vm780 = vcmp.lt.s32.totalorder %v775, %v777
      %v781 = vsel %vm780, %v775, %v777
      %vm782 = vcmp.lt.s32.totalorder %v779, %v781
      %v783 = vsel %vm782, %v779, %v781
      %v784 = vrot.slane %v783, 4
      %vm785 = vcmp.lt.s32.totalorder %v783, %v784
      %v786 = vsel %vm785, %v783, %v784
      %v787 = vrot.slane %v786, 2
      %vm788 = vcmp.lt.s32.totalorder %v786, %v787
      %v789 = vsel %vm788, %v786, %v787
      %v790 = vrot.slane %v789, 1
      %vm791 = vcmp.lt.s32.totalorder %v789, %v790
      %v792 = vsel %vm791, %v789, %v790
      %s793 = scalar_lea.vmem [#allocation5], %s23
      %v794 = vld [vmem:[%s793] sm:$0x1]
      %s795 = sshra.s32 %s455, 7
      %s796 = sand.u32 %s455, 127
      %s797 = scalar_lea.vmem %s290, %s795
      %v798 = vld [vmem:[%s797] sm:$0x1]
      %vm799 = vcmp.gt.f32.partialorder %v753, %v794
      %v800 = vsel %vm799, %v792, %v798
      %801 = vst [vmem:[%s797] sm:$0x1] %v800
      %v802 = vmax.f32 %v794, %v753
      %803 = vst [vmem:[%s793] sm:$0x1] %v802
      %s804 = smul.u32 8, %s22
      %p805 = scmp.lt.s32.totalorder %s21, 1
      %s806 = scalar_select %p805, %s21, 1
      %p807 = scmp.lt.s32.totalorder %s804, 7
      %s808 = scalar_select %p807, %s804, 7
      %s809 = smul.addr %s806, 8
      %s810 = sadd.s32 %s808, %s809
      %s811 = smul.addr %s810, 8
      %s812 = scalar_lea.vmem %s2, %s811
      %p813 = scmp.lt.s32.totalorder %s21, 1
      %s814 = scalar_select %p813, %s21, 1
      %s815 = scalar_lea.vmem %s3, %s814
      // Predicated region
      $region41: #{neural_best_buddies.1} parent=27 // pred_check
        %p816 = pneg %p121
      $region42: #{neural_best_buddies.1} parent=27 // pred_check_branch
        %818 = sbr.rel (%p816) target = $region44
      $region43: #{neural_best_buddies.1} parent=27 // pred_region
        %s819 = smul.u32 8, %s22
      $region44: #{neural_best_buddies.1} parent=27 // pred_fallthru
        _
      // Predicated region
      $region45: #{neural_best_buddies.1} parent=27 // pred_check
        %p820 = pneg %p147
      $region46: #{neural_best_buddies.1} parent=27 // pred_check_branch
        %822 = sbr.rel (%p820) target = $region48
      $region47: #{neural_best_buddies.1} parent=27 // pred_region
        _
      $region48: #{neural_best_buddies.1} parent=27 // pred_fallthru
        _
    $region28: #{neural_best_buddies.1} parent=5 // pred_fallthru
      _
    %p823 = scmp.le.s32.totalorder 2, %s10
    // Predicated region
    $region49: #{neural_best_buddies.1} parent=5 // pred_check
      %p824 = pneg %p823
    $region50: #{neural_best_buddies.1} parent=5 // pred_check_branch
      %826 = sbr.rel (%p824) target = $region52
    $region51: #{neural_best_buddies.1} parent=5 // pred_region
      %s827 = ssub.s32 %s10, 2
      // Predicated region
      $region53: #{neural_best_buddies.1} parent=51 // pred_check
        %p828 = pneg %p127
      $region54: #{neural_best_buddies.1} parent=51 // pred_check_branch
        %830 = sbr.rel (%p828) target = $region56
      $region55: #{neural_best_buddies.1} parent=51 // pred_region
        %s831 = smul.u32 8, %s26
        %p832 = scmp.lt.s32.totalorder %s25, 1
        %s833 = scalar_select %p832, %s25, 1
        %p834 = scmp.lt.s32.totalorder %s831, 7
        %s835 = scalar_select %p834, %s831, 7
        %s836 = smul.addr %s833, 8
        %s837 = sadd.s32 %s835, %s836
        %s838 = smul.addr %s837, 8
        %s839 = scalar_lea.vmem %s2, %s838
      $region56: #{neural_best_buddies.1} parent=51 // pred_fallthru
        _
      // Predicated region
      $region57: #{neural_best_buddies.1} parent=51 // pred_check
        %p840 = pneg %p153
      $region58: #{neural_best_buddies.1} parent=51 // pred_check_branch
        %842 = sbr.rel (%p840) target = $region60
      $region59: #{neural_best_buddies.1} parent=51 // pred_region
        %p843 = scmp.lt.s32.totalorder %s25, 1
        %s844 = scalar_select %p843, %s25, 1
        %s845 = scalar_lea.vmem %s3, %s844
      $region60: #{neural_best_buddies.1} parent=51 // pred_fallthru
        _
    $region52: #{neural_best_buddies.1} parent=5 // pred_fallthru
      _
  $region6: #{neural_best_buddies.1} parent=0 // loop_footer
    %s14 = sadd.s32 1, %s10
  $region7: #{neural_best_buddies.1} parent=0 // loop_footer_branch
    %9 = sbr.rel target = $region3
  $region8: #{neural_best_buddies.1} parent=0 // loop_exit
    _

</llo_original>
